<compile_context>
chip_gen: v7x
topology: tpu7x:2x2x1
jax: 0.10.0
libtpu: 0.0.40
codegen_flags: <defaults>
</compile_context>

<pallas_src>
import functools

import jax
import jax.numpy as jnp
from jax.experimental import pallas as pl
from jax.experimental.pallas import tpu as pltpu

LANE = 128      # TPU vreg lane width      (last dim)
SUBLANE = 8     # TPU vreg sublane width   (second-to-last dim)


def _round_up(v, m):
    return ((v + m - 1) // m) * m


def _pad_to(a, shape):
    return jnp.pad(a, [(0, s - d) for d, s in zip(a.shape, shape)])


def _vmem_limit_bytes():
    """Generation-gated scoped-VMEM budget: ~75% of physical, capped at 100 MiB.
       v5e/v6e (128 MiB phys) -> 96/100 MiB  (lifts the 16/32 MiB scoped default)
       v7x     ( 64 MiB phys) -> 48 MiB      (headroom for compiler scratch)"""
    try:
        cap = pltpu.get_tpu_info().vmem_capacity_bytes
    except Exception:
        cap = 64 * 1024 * 1024                      # conservative fallback
    return int(min(cap * 3 // 4, 100 * 1024 * 1024))


def _nbytes(*arrays):
    return int(sum(a.size * a.dtype.itemsize for a in arrays))


# ---------------------------------------------------------------------------
# Kernel 1: fused fully-resident path (small / demo-sized graphs)
# ---------------------------------------------------------------------------
def _fused_kernel(
    x_ref,      # (Np, Ip)  bf16 node features
    adj_ref,    # (Np, Np)  bf16 normalized adjacency (zero-padded rows/cols)
    pool_ref,   # (Gp, Np)  bf16 mean-pool matrix
    wa1_ref,    # (Ip, Hp)  bf16 folded adapter+layer1 weight  Wa @ W1
    ba1_ref,    # (1,  Hp)  f32  folded adapter bias           ba @ W1
    b1_ref,     # (1,  Hp)  f32
    w2_ref,     # (Hp, Hp)  bf16
    b2_ref,     # (1,  Hp)  f32
    wo_ref,     # (Hp, Op)  bf16 output head weight (pre-transposed)
    bo_ref,     # (1,  Op)  f32
    out_ref,    # (Gp, Op)  f32
):
    f32, bf16 = jnp.float32, jnp.bfloat16
    adj = adj_ref[...]

    # Layer 1 (adapter folded):  A @ (x @ (Wa@W1) + ba@W1) + b1
    t = jnp.dot(x_ref[...], wa1_ref[...], preferred_element_type=f32) + ba1_ref[...]
    h1 = jnp.maximum(
        jnp.dot(adj, t.astype(bf16), preferred_element_type=f32) + b1_ref[...], 0.0)

    # Layer 2
    h2 = jnp.dot(h1.astype(bf16), w2_ref[...], preferred_element_type=f32)
    h2 = jnp.maximum(
        jnp.dot(adj, h2.astype(bf16), preferred_element_type=f32) + b2_ref[...], 0.0)

    # Global mean pool per graph + output head
    pooled = jnp.dot(pool_ref[...], h2.astype(bf16), preferred_element_type=f32)
    out_ref[...] = (jnp.dot(pooled.astype(bf16), wo_ref[...],
                            preferred_element_type=f32) + bo_ref[...]).astype(out_ref.dtype)


def _fused_forward(x_p, adj_p, pool_p, pp):
    np_, ip_ = x_p.shape
    gp_ = pool_p.shape[0]
    hp_ = pp["wa1"].shape[1]
    op_ = pp["wo"].shape[1]

    args = (x_p, adj_p, pool_p, pp["wa1"], pp["ba1"], pp["b1"],
            pp["w2"], pp["b2"], pp["wo"], pp["bo"])

    flops = 2 * (np_ * ip_ * hp_ + 2 * np_ * np_ * hp_ + np_ * hp_ * hp_
                 + gp_ * np_ * hp_ + gp_ * hp_ * op_)
    bytes_accessed = _nbytes(*args) + gp_ * op_ * 4

    vmem = pl.BlockSpec(memory_space=pltpu.MemorySpace.VMEM)
    return pl.pallas_call(
        _fused_kernel,
        out_shape=jax.ShapeDtypeStruct((gp_, op_), jnp.float32),
        in_specs=[vmem] * len(args),
        out_specs=vmem,
        cost_estimate=pl.CostEstimate(flops=flops, transcendentals=0,
                                      bytes_accessed=bytes_accessed),
        compiler_params=pltpu.CompilerParams(vmem_limit_bytes=_vmem_limit_bytes()),
    )(*args)


# ---------------------------------------------------------------------------
# Kernels 2-4: row-tiled / streamed path (large graphs, dual-TC on v7x)
# ---------------------------------------------------------------------------
def _layer1_kernel(adj_ref, rowsum_ref, x_ref, wa1_ref, ba1_ref, b1_ref, h1_ref):
    # h1[rows] = relu((A[rows,:] @ x) @ (Wa@W1) + rowsum(A)[rows] * (ba@W1) + b1)
    f32, bf16 = jnp.float32, jnp.bfloat16
    ax = jnp.dot(adj_ref[...], x_ref[...], preferred_element_type=f32)
    t = jnp.dot(ax.astype(bf16), wa1_ref[...], preferred_element_type=f32)
    t = t + rowsum_ref[...] * ba1_ref[...] + b1_ref[...]
    h1_ref[...] = jnp.maximum(t, 0.0).astype(h1_ref.dtype)


def _layer2_kernel(adj_ref, h1_ref, w2_ref, b2_ref, h2_ref):
    # h2[rows] = relu((A[rows,:] @ h1) @ W2 + b2)
    f32, bf16 = jnp.float32, jnp.bfloat16
    ah = jnp.dot(adj_ref[...], h1_ref[...], preferred_element_type=f32)
    t = jnp.dot(ah.astype(bf16), w2_ref[...], preferred_element_type=f32) + b2_ref[...]
    h2_ref[...] = jnp.maximum(t, 0.0).astype(h2_ref.dtype)


def _pool_head_kernel(pool_ref, h2_ref, wo_ref, bo_ref, out_ref):
    f32, bf16 = jnp.float32, jnp.bfloat16
    pooled = jnp.dot(pool_ref[...], h2_ref[...], preferred_element_type=f32)
    out_ref[...] = (jnp.dot(pooled.astype(bf16), wo_ref[...],
                            preferred_element_type=f32) + bo_ref[...]).astype(out_ref.dtype)


def _pick_row_tile(np_):
    for t in (512, 256, 128):
        if np_ % t == 0:
            return t
    return np_


def _tiled_forward(x_p, adj_p, rowsum_p, pool_p, pp):
    np_, ip_ = x_p.shape
    gp_ = pool_p.shape[0]
    hp_ = pp["wa1"].shape[1]
    op_ = pp["wo"].shape[1]
    tm = _pick_row_tile(np_)
    n_tiles = np_ // tm
    vmem_lim = _vmem_limit_bytes()

    # ------- Layer 1: row-parallel stream of adjacency stripes -------------
    l1_flops = 2 * (np_ * np_ * ip_ + np_ * ip_ * hp_)
    l1_bytes = _nbytes(adj_p, rowsum_p, x_p, pp["wa1"], pp["ba1"], pp["b1"]) + np_ * hp_ * 2
    h1 = pl.pallas_call(
        _layer1_kernel,
        out_shape=jax.ShapeDtypeStruct((np_, hp_), jnp.bfloat16),
        grid=(n_tiles,),
        in_specs=[
            pl.BlockSpec((tm, np_), lambda i: (i, 0)),    # adjacency row stripe
            pl.BlockSpec((tm, 1),   lambda i: (i, 0)),    # adjacency row sums
            pl.BlockSpec((np_, ip_), lambda i: (0, 0)),   # x (resident across steps)
            pl.BlockSpec((ip_, hp_), lambda i: (0, 0)),   # folded Wa@W1
            pl.BlockSpec((1, hp_),  lambda i: (0, 0)),    # folded ba@W1
            pl.BlockSpec((1, hp_),  lambda i: (0, 0)),    # b1
        ],
        out_specs=pl.BlockSpec((tm, hp_), lambda i: (i, 0)),
        cost_estimate=pl.CostEstimate(flops=l1_flops, transcendentals=0,
                                      bytes_accessed=l1_bytes),
        compiler_params=pltpu.CompilerParams(
            dimension_semantics=("parallel",), vmem_limit_bytes=vmem_lim),
    )(adj_p, rowsum_p, x_p, pp["wa1"], pp["ba1"], pp["b1"])

    # ------- Layer 2: row-parallel stream of adjacency stripes -------------
    l2_flops = 2 * (np_ * np_ * hp_ + np_ * hp_ * hp_)
    l2_bytes = _nbytes(adj_p, h1, pp["w2"], pp["b2"]) + np_ * hp_ * 2
    h2 = pl.pallas_call(
        _layer2_kernel,
        out_shape=jax.ShapeDtypeStruct((np_, hp_), jnp.bfloat16),
        grid=(n_tiles,),
        in_specs=[
            pl.BlockSpec((tm, np_), lambda i: (i, 0)),
            pl.BlockSpec((np_, hp_), lambda i: (0, 0)),
            pl.BlockSpec((hp_, hp_), lambda i: (0, 0)),
            pl.BlockSpec((1, hp_),  lambda i: (0, 0)),
        ],
        out_specs=pl.BlockSpec((tm, hp_), lambda i: (i, 0)),
        cost_estimate=pl.CostEstimate(flops=l2_flops, transcendentals=0,
                                      bytes_accessed=l2_bytes),
        compiler_params=pltpu.CompilerParams(
            dimension_semantics=("parallel",), vmem_limit_bytes=vmem_lim),
    )(adj_p, h1, pp["w2"], pp["b2"])

    # ------- Pool + head (small, gridless) ----------------------------------
    # TODO(synk): tile this call too (accumulate per row stripe) for N >> 64K.
    ph_flops = 2 * (gp_ * np_ * hp_ + gp_ * hp_ * op_)
    ph_bytes = _nbytes(pool_p, h2, pp["wo"], pp["bo"]) + gp_ * op_ * 4
    vmem = pl.BlockSpec(memory_space=pltpu.MemorySpace.VMEM)
    return pl.pallas_call(
        _pool_head_kernel,
        out_shape=jax.ShapeDtypeStruct((gp_, op_), jnp.float32),
        in_specs=[vmem] * 4,
        out_specs=vmem,
        cost_estimate=pl.CostEstimate(flops=ph_flops, transcendentals=0,
                                      bytes_accessed=ph_bytes),
        compiler_params=pltpu.CompilerParams(vmem_limit_bytes=vmem_lim),
    )(pool_p, h2, pp["wo"], pp["bo"])


# ---------------------------------------------------------------------------
# Dispatch wrapper (all inputs already padded / bf16-cast outside this path)
# ---------------------------------------------------------------------------
@functools.partial(jax.jit, static_argnames=("num_graphs", "out_dim", "force_tiled"))
def adaptive_gcn_forward(x_p, adj_p, rowsum_p, pool_p, pp, num_graphs, out_dim,
                         force_tiled=False):
    np_ = adj_p.shape[0]
    # Small padded graphs: one fused, fully-resident call (launch-overhead regime).
    # Large graphs: row-tiled streaming path (VMEM-bounded, dual-TC on v7x).
    if force_tiled or np_ > 2048:
        out_p = _tiled_forward(x_p, adj_p, rowsum_p, pool_p, pp)
    else:
        out_p = _fused_forward(x_p, adj_p, pool_p, pp)
    return out_p[:num_graphs, :out_dim]


# ---------------------------------------------------------------------------
# One-time preprocessing (outside the per-call path): padding, folding, casts
# ---------------------------------------------------------------------------
def prepare_params(params, input_dim, hidden_dim, out_dim):
    """Fold the adapter Linear into GCN layer 1, pad to lane-dense tiles,
    cast weight matrices to bf16 (biases stay f32).  Done once."""
    wa, ba, w1, b1, w2, b2, wo, bo = params
    wa1 = wa @ w1            # (in_dim, hid)   == adapter weight folded into layer 1
    ba1 = ba @ w1            # (1, hid)        == adapter bias   folded into layer 1
    ip_ = _round_up(input_dim, LANE)
    hp_ = _round_up(hidden_dim, LANE)
    op_ = _round_up(out_dim, LANE)
    return {
        "wa1": _pad_to(wa1, (ip_, hp_)).astype(jnp.bfloat16),
        "ba1": _pad_to(ba1, (1, hp_)),
        "b1":  _pad_to(b1,  (1, hp_)),
        "w2":  _pad_to(w2,  (hp_, hp_)).astype(jnp.bfloat16),
        "b2":  _pad_to(b2,  (1, hp_)),
        "wo":  _pad_to(wo,  (hp_, op_)).astype(jnp.bfloat16),
        "bo":  _pad_to(bo,  (1, op_)),
    }


def prepare_graph(x, adj_norm, pool_mat):
    """Pad node features / adjacency / pool matrix to lane/sublane-dense tiles
    and cast to bf16; also precompute adjacency row sums (f32).  Done once per
    graph batch, outside the jitted forward."""
    n, in_dim = x.shape
    g = pool_mat.shape[0]
    np_ = _round_up(n, LANE)
    ip_ = _round_up(in_dim, LANE)
    gp_ = _round_up(g, SUBLANE)
    adj_p_f32 = _pad_to(adj_norm, (np_, np_))
    rowsum_p = jnp.sum(adj_p_f32, axis=1, keepdims=True)       # (np_, 1) f32
    x_p = _pad_to(x, (np_, ip_)).astype(jnp.bfloat16)
    adj_p = adj_p_f32.astype(jnp.bfloat16)
    pool_p = _pad_to(pool_mat, (gp_, np_)).astype(jnp.bfloat16)
    return x_p, adj_p, rowsum_p, pool_p


# ---------------------------------------------------------------------------
# Glue: graph preprocessing, parameter init, pure-JAX reference
# ---------------------------------------------------------------------------
def build_norm_adjacency(edge_index, num_nodes):
    """Dense symmetric-normalized adjacency D^-1/2 (A + I) D^-1/2."""
    src, dst = edge_index[0], edge_index[1]
    adj = jnp.zeros((num_nodes, num_nodes), jnp.float32)
    adj = adj.at[src, dst].set(1.0)
    adj = adj.at[dst, src].set(1.0)                      # undirected
    adj = adj + jnp.eye(num_nodes, dtype=jnp.float32)    # self loops
    deg = jnp.sum(adj, axis=1)
    d_inv_sqrt = 1.0 / jnp.sqrt(deg)
    return adj * d_inv_sqrt[:, None] * d_inv_sqrt[None, :]


def build_pool_matrix(batch, num_graphs):
    """(G, N) matrix whose rows mean-pool the nodes of each graph."""
    onehot = (batch[None, :] == jnp.arange(num_graphs)[:, None]).astype(jnp.float32)
    counts = jnp.sum(onehot, axis=1, keepdims=True)
    return onehot / jnp.maximum(counts, 1.0)


def init_params(key, input_dim, target_dim, hidden_dim, out_dim):
    """He (kaiming_normal, fan_in, relu) init, zero bias.
    Weights stored already transposed to (in, out) for the kernel."""
    ks = jax.random.split(key, 4)

    def he(k, fan_in, fan_out):
        std = jnp.sqrt(2.0 / fan_in)
        return jax.random.normal(k, (fan_in, fan_out), jnp.float32) * std

    wa = he(ks[0], input_dim, target_dim)
    ba = jnp.zeros((1, target_dim), jnp.float32)
    w1 = he(ks[1], target_dim, hidden_dim)
    b1 = jnp.zeros((1, hidden_dim), jnp.float32)
    w2 = he(ks[2], hidden_dim, hidden_dim)
    b2 = jnp.zeros((1, hidden_dim), jnp.float32)
    wo = he(ks[3], hidden_dim, out_dim)
    bo = jnp.zeros((1, out_dim), jnp.float32)
    return (wa, ba, w1, b1, w2, b2, wo, bo)


def reference_forward(x, adj_norm, pool_mat, params):
    """Plain-JAX f32 reference with the module's original (unfolded) ordering."""
    wa, ba, w1, b1, w2, b2, wo, bo = params
    x_adapted = x @ wa + ba
    h1 = jax.nn.relu(adj_norm @ (x_adapted @ w1) + b1)
    h2 = jax.nn.relu(adj_norm @ (h1 @ w2) + b2)
    pooled = pool_mat @ h2
    return pooled @ wo + bo


# ---------------------------------------------------------------------------
if __name__ == "__main__":
    key = jax.random.PRNGKey(0)
    k_x, k_p = jax.random.split(key)

    # Small, module-consistent shapes.
    num_nodes = 16          # 2 graphs of 8 nodes each
    input_dim = 12          # dataset feature dim
    target_dim = 32         # base-model expected feature dim (adapter expands)
    hidden_dim = 32
    out_dim = 2             # predicted (lat, lon)
    num_graphs = 2

    # Node features [num_nodes, input_dim]
    x = jax.random.normal(k_x, (num_nodes, input_dim), jnp.float32)

    # edge_index [2, num_edges]: ring graph inside each subgraph
    edges = []
    for gidx in range(num_graphs):
        base = gidx * 8
        for i in range(8):
            edges.append((base + i, base + (i + 1) % 8))
    edge_index = jnp.asarray(edges, dtype=jnp.int32).T   # (2, 16)

    # batch vector [num_nodes]
    batch = jnp.repeat(jnp.arange(num_graphs, dtype=jnp.int32), 8)

    adj_norm = build_norm_adjacency(edge_index, num_nodes)
    pool_mat = build_pool_matrix(batch, num_graphs)
    params = init_params(k_p, input_dim, target_dim, hidden_dim, out_dim)

    # One-time preprocessing (padding / folding / bf16 casts) outside the jit.
    pp = prepare_params(params, input_dim, hidden_dim, out_dim)
    x_p, adj_p, rowsum_p, pool_p = prepare_graph(x, adj_norm, pool_mat)

    # Fast fused path (what small graphs use) and the tiled/streamed path
    # (what large graphs use) — run and validate both against the f32 reference.
    out_fused = adaptive_gcn_forward(x_p, adj_p, rowsum_p, pool_p, pp,
                                     num_graphs, out_dim, force_tiled=False)
    out_tiled = adaptive_gcn_forward(x_p, adj_p, rowsum_p, pool_p, pp,
                                     num_graphs, out_dim, force_tiled=True)
    out_fused, out_tiled = jax.block_until_ready((out_fused, out_tiled))

    ref = reference_forward(x, adj_norm, pool_mat, params)

    for name, out in (("fused", out_fused), ("tiled", out_tiled)):
        assert out.shape == (num_graphs, out_dim), (name, out.shape)
        assert out.dtype == jnp.float32, (name, out.dtype)
        assert bool(jnp.all(jnp.isfinite(out))), name
        assert bool(jnp.allclose(out, ref, rtol=5e-2, atol=5e-2)), (
            f"{name}: max abs diff {float(jnp.max(jnp.abs(out - ref)))}"
        )
    print("KERNEL_OK")
</pallas_src>

<mosaic_0001>
module attributes {stable_mosaic.version = 11 : i64} {
  func.func @_fused_kernel(%arg0: memref<128x128xbf16, #tpu.memory_space<vmem>>, %arg1: memref<128x128xbf16, #tpu.memory_space<vmem>>, %arg2: memref<8x128xbf16, #tpu.memory_space<vmem>>, %arg3: memref<128x128xbf16, #tpu.memory_space<vmem>>, %arg4: memref<1x128xf32, #tpu.memory_space<vmem>>, %arg5: memref<1x128xf32, #tpu.memory_space<vmem>>, %arg6: memref<128x128xbf16, #tpu.memory_space<vmem>>, %arg7: memref<1x128xf32, #tpu.memory_space<vmem>>, %arg8: memref<128x128xbf16, #tpu.memory_space<vmem>>, %arg9: memref<1x128xf32, #tpu.memory_space<vmem>>, %arg10: memref<8x128xf32, #tpu.memory_space<vmem>>) attributes {dimension_semantics = [], scalar_prefetch = 0 : i64, scratch_operands = 0 : i64, tpu.core_type = #tpu.core_type<tc>} {
    %c0 = arith.constant 0 : index
    %c0_0 = arith.constant 0 : index
    %0 = vector.load %arg1[%c0, %c0_0] : memref<128x128xbf16, #tpu.memory_space<vmem>>, vector<128x128xbf16>
    %c0_1 = arith.constant 0 : index
    %c0_2 = arith.constant 0 : index
    %1 = vector.load %arg0[%c0_1, %c0_2] : memref<128x128xbf16, #tpu.memory_space<vmem>>, vector<128x128xbf16>
    %c0_3 = arith.constant 0 : index
    %c0_4 = arith.constant 0 : index
    %2 = vector.load %arg3[%c0_3, %c0_4] : memref<128x128xbf16, #tpu.memory_space<vmem>>, vector<128x128xbf16>
    %cst = arith.constant dense<0.000000e+00> : vector<128x128xf32>
    %3 = tpu.matmul %1, %2, %cst {dimension_numbers = #tpu.dot_dimension_numbers<[1], [0], [0], [1], [0, 0, 1, 1], [], []>} : vector<128x128xbf16>, vector<128x128xbf16>, vector<128x128xf32> -> vector<128x128xf32>
    %c0_5 = arith.constant 0 : index
    %c0_6 = arith.constant 0 : index
    %4 = vector.load %arg4[%c0_5, %c0_6] : memref<1x128xf32, #tpu.memory_space<vmem>>, vector<1x128xf32>
    %5 = vector.broadcast %4 : vector<1x128xf32> to vector<128x128xf32>
    %6 = arith.addf %3, %5 : vector<128x128xf32>
    %7 = arith.truncf %6 : vector<128x128xf32> to vector<128x128xbf16>
    %cst_7 = arith.constant dense<0.000000e+00> : vector<128x128xf32>
    %8 = tpu.matmul %0, %7, %cst_7 {dimension_numbers = #tpu.dot_dimension_numbers<[1], [0], [0], [1], [0, 0, 1, 1], [], []>} : vector<128x128xbf16>, vector<128x128xbf16>, vector<128x128xf32> -> vector<128x128xf32>
    %c0_8 = arith.constant 0 : index
    %c0_9 = arith.constant 0 : index
    %9 = vector.load %arg5[%c0_8, %c0_9] : memref<1x128xf32, #tpu.memory_space<vmem>>, vector<1x128xf32>
    %10 = vector.broadcast %9 : vector<1x128xf32> to vector<128x128xf32>
    %11 = arith.addf %8, %10 : vector<128x128xf32>
    %cst_10 = arith.constant 0.000000e+00 : f32
    %12 = vector.broadcast %cst_10 : f32 to vector<128x128xf32>
    %13 = arith.maximumf %11, %12 : vector<128x128xf32>
    %14 = arith.truncf %13 : vector<128x128xf32> to vector<128x128xbf16>
    %c0_11 = arith.constant 0 : index
    %c0_12 = arith.constant 0 : index
    %15 = vector.load %arg6[%c0_11, %c0_12] : memref<128x128xbf16, #tpu.memory_space<vmem>>, vector<128x128xbf16>
    %cst_13 = arith.constant dense<0.000000e+00> : vector<128x128xf32>
    %16 = tpu.matmul %14, %15, %cst_13 {dimension_numbers = #tpu.dot_dimension_numbers<[1], [0], [0], [1], [0, 0, 1, 1], [], []>} : vector<128x128xbf16>, vector<128x128xbf16>, vector<128x128xf32> -> vector<128x128xf32>
    %17 = arith.truncf %16 : vector<128x128xf32> to vector<128x128xbf16>
    %cst_14 = arith.constant dense<0.000000e+00> : vector<128x128xf32>
    %18 = tpu.matmul %0, %17, %cst_14 {dimension_numbers = #tpu.dot_dimension_numbers<[1], [0], [0], [1], [0, 0, 1, 1], [], []>} : vector<128x128xbf16>, vector<128x128xbf16>, vector<128x128xf32> -> vector<128x128xf32>
    %c0_15 = arith.constant 0 : index
    %c0_16 = arith.constant 0 : index
    %19 = vector.load %arg7[%c0_15, %c0_16] : memref<1x128xf32, #tpu.memory_space<vmem>>, vector<1x128xf32>
    %20 = vector.broadcast %19 : vector<1x128xf32> to vector<128x128xf32>
    %21 = arith.addf %18, %20 : vector<128x128xf32>
    %cst_17 = arith.constant 0.000000e+00 : f32
    %22 = vector.broadcast %cst_17 : f32 to vector<128x128xf32>
    %23 = arith.maximumf %21, %22 : vector<128x128xf32>
    %c0_18 = arith.constant 0 : index
    %c0_19 = arith.constant 0 : index
    %24 = vector.load %arg2[%c0_18, %c0_19] : memref<8x128xbf16, #tpu.memory_space<vmem>>, vector<8x128xbf16>
    %25 = arith.truncf %23 : vector<128x128xf32> to vector<128x128xbf16>
    %cst_20 = arith.constant dense<0.000000e+00> : vector<8x128xf32>
    %26 = tpu.matmul %24, %25, %cst_20 {dimension_numbers = #tpu.dot_dimension_numbers<[1], [0], [0], [1], [0, 0, 1, 1], [], []>} : vector<8x128xbf16>, vector<128x128xbf16>, vector<8x128xf32> -> vector<8x128xf32>
    %27 = arith.truncf %26 : vector<8x128xf32> to vector<8x128xbf16>
    %c0_21 = arith.constant 0 : index
    %c0_22 = arith.constant 0 : index
    %28 = vector.load %arg8[%c0_21, %c0_22] : memref<128x128xbf16, #tpu.memory_space<vmem>>, vector<128x128xbf16>
    %cst_23 = arith.constant dense<0.000000e+00> : vector<8x128xf32>
    %29 = tpu.matmul %27, %28, %cst_23 {dimension_numbers = #tpu.dot_dimension_numbers<[1], [0], [0], [1], [0, 0, 1, 1], [], []>} : vector<8x128xbf16>, vector<128x128xbf16>, vector<8x128xf32> -> vector<8x128xf32>
    %c0_24 = arith.constant 0 : index
    %c0_25 = arith.constant 0 : index
    %30 = vector.load %arg9[%c0_24, %c0_25] : memref<1x128xf32, #tpu.memory_space<vmem>>, vector<1x128xf32>
    %31 = vector.broadcast %30 : vector<1x128xf32> to vector<8x128xf32>
    %32 = arith.addf %29, %31 : vector<8x128xf32>
    %c0_26 = arith.constant 0 : index
    %c0_27 = arith.constant 0 : index
    %33 = vector.load %arg10[%c0_26, %c0_27] : memref<8x128xf32, #tpu.memory_space<vmem>>, vector<8x128xf32>
    tpu.vector_store %arg10[%c0_26, %c0_27], %32 {strides = array<i32>} : memref<8x128xf32, #tpu.memory_space<vmem>>, vector<8x128xf32>,
    return
  }
}

</mosaic_0001>

<llo_original>
// kernel: adaptive_gcn_forward.1
$region0: #{adaptive_gcn_forward.1}
  #allocation0 [shape = 'u32[]', space=smem, size = 0x4, offset = 0x4, fixed_abs, tag = 'smem constant byte address 0x4 - core index']
  #allocation1 [shape = 'u32[144,128]{1,0:T(1,128)}', space=vmem, size = 0x12000, scoped, tag = 'internal scratch']
  %s0 = inlined_call_operand.hbm [shape: bf16[128,128], index: 0, kind: input, shape index: {}]
  %s1 = inlined_call_operand.hbm [shape: bf16[128,128], index: 1, kind: input, shape index: {}]
  %s2 = inlined_call_operand.vmem [shape: bf16[8,128], index: 2, kind: input, shape index: {}]
  %s3 = inlined_call_operand.hbm [shape: bf16[128,128], index: 3, kind: input, shape index: {}]
  %s4 = inlined_call_operand.vmem [shape: f32[1,128], index: 4, kind: input, shape index: {}]
  %s5 = inlined_call_operand.vmem [shape: f32[1,128], index: 5, kind: input, shape index: {}]
  %s6 = inlined_call_operand.hbm [shape: bf16[128,128], index: 6, kind: input, shape index: {}]
  %s7 = inlined_call_operand.vmem [shape: f32[1,128], index: 7, kind: input, shape index: {}]
  %s8 = inlined_call_operand.hbm [shape: bf16[128,128], index: 8, kind: input, shape index: {}]
  %s9 = inlined_call_operand.vmem [shape: f32[1,128], index: 9, kind: input, shape index: {}]
  %s10 = inlined_call_operand.vmem [shape: f32[8,128], index: 10, kind: output, shape index: {}]
  %s11 = sld [smem:[#allocation0]]
  $region70: #{adaptive_gcn_forward.1} parent=0
    _
  %s13 = ssub.s32 1, %s11
  %s14 = scalar_select 0, %s13, %s11
  $region1: #{adaptive_gcn_forward.1} parent=0
    #allocation2 [shape = 'u8[32768]{0}', space=vmem, size = 0x8000, scoped, tag = 'input window, operand 0, single buffered']
    #allocation3 [shape = 's32[1]{0}', space=sflag, size = 0x4, scoped, tag = 'scoped memory for adaptive_gcn_forward.1']
    #allocation4 [shape = 'u8[32768]{0}', space=vmem, size = 0x8000, scoped, tag = 'input window, operand 1, single buffered']
    #allocation5 [shape = 's32[1]{0}', space=sflag, size = 0x4, scoped, tag = 'scoped memory for adaptive_gcn_forward.1']
    #allocation6 [shape = 'u8[32768]{0}', space=vmem, size = 0x8000, scoped, tag = 'input window, operand 3, single buffered']
    #allocation7 [shape = 'u8[32768]{0}', space=vmem, size = 0x8000, scoped, tag = 'input window, operand 6, single buffered']
    #allocation8 [shape = 's32[1]{0}', space=sflag, size = 0x4, scoped, tag = 'scoped memory for adaptive_gcn_forward.1']
    #allocation9 [shape = 'u8[32768]{0}', space=vmem, size = 0x8000, scoped, tag = 'input window, operand 8, single buffered']
    %15 = vsyncpa [#allocation3], 0
    %16 = vsyncpa [#allocation5], 0
    %17 = vsyncpa [#allocation8], 0
    // Predicated region
    $region2: #{adaptive_gcn_forward.1} parent=1 // pred_check
      _
    $region3: #{adaptive_gcn_forward.1} parent=1 // pred_check_branch
      %19 = sbr.rel (0) target = $region5
    $region4: #{adaptive_gcn_forward.1} parent=1 // pred_region
      %s21 = ssub.s32 1024, 1024
      %22 = vsyncadd [#allocation3], %s21
      %s23 = sshll.u32 [#allocation2], 4
      %s24 = int_to_ptr.vmem [resolvable:$true] %s23
      %29 = dma.hbm_to_vmem [thread:$0]  %s0, 1024, %s24, [#allocation3], 64, 64, 4
    $region5: #{adaptive_gcn_forward.1} parent=1 // pred_fallthru
      _
    // Predicated region
    $region6: #{adaptive_gcn_forward.1} parent=1 // pred_check
      _
    $region7: #{adaptive_gcn_forward.1} parent=1 // pred_check_branch
      %31 = sbr.rel (0) target = $region9
    $region8: #{adaptive_gcn_forward.1} parent=1 // pred_region
      %s33 = ssub.s32 1024, 1024
      %34 = vsyncadd [#allocation5], %s33
      %s35 = sshll.u32 [#allocation4], 4
      %s36 = int_to_ptr.vmem [resolvable:$true] %s35
      %41 = dma.hbm_to_vmem [thread:$0]  %s1, 1024, %s36, [#allocation5], 64, 64, 4
    $region9: #{adaptive_gcn_forward.1} parent=1 // pred_fallthru
      _
    // Predicated region
    $region10: #{adaptive_gcn_forward.1} parent=1 // pred_check
      _
    $region11: #{adaptive_gcn_forward.1} parent=1 // pred_check_branch
      %43 = sbr.rel (0) target = $region13
    $region12: #{adaptive_gcn_forward.1} parent=1 // pred_region
      _
    $region13: #{adaptive_gcn_forward.1} parent=1 // pred_fallthru
      _
    // Predicated region
    $region14: #{adaptive_gcn_forward.1} parent=1 // pred_check
      _
    $region15: #{adaptive_gcn_forward.1} parent=1 // pred_check_branch
      %45 = sbr.rel (0) target = $region17
    $region16: #{adaptive_gcn_forward.1} parent=1 // pred_region
      %s47 = ssub.s32 1024, 1024
      %48 = vsyncadd [#allocation5], %s47
      %s49 = sshll.u32 [#allocation6], 4
      %s50 = int_to_ptr.vmem [resolvable:$true] %s49
      %55 = dma.hbm_to_vmem [thread:$0]  %s3, 1024, %s50, [#allocation5], 64, 64, 4
    $region17: #{adaptive_gcn_forward.1} parent=1 // pred_fallthru
      _
    // Predicated region
    $region18: #{adaptive_gcn_forward.1} parent=1 // pred_check
      _
    $region19: #{adaptive_gcn_forward.1} parent=1 // pred_check_branch
      %57 = sbr.rel (0) target = $region21
    $region20: #{adaptive_gcn_forward.1} parent=1 // pred_region
      _
    $region21: #{adaptive_gcn_forward.1} parent=1 // pred_fallthru
      _
    // Predicated region
    $region22: #{adaptive_gcn_forward.1} parent=1 // pred_check
      _
    $region23: #{adaptive_gcn_forward.1} parent=1 // pred_check_branch
      %59 = sbr.rel (0) target = $region25
    $region24: #{adaptive_gcn_forward.1} parent=1 // pred_region
      _
    $region25: #{adaptive_gcn_forward.1} parent=1 // pred_fallthru
      _
    // Predicated region
    $region26: #{adaptive_gcn_forward.1} parent=1 // pred_check
      _
    $region27: #{adaptive_gcn_forward.1} parent=1 // pred_check_branch
      %61 = sbr.rel (0) target = $region29
    $region28: #{adaptive_gcn_forward.1} parent=1 // pred_region
      %s63 = ssub.s32 1024, 1024
      %64 = vsyncadd [#allocation8], %s63
      %s65 = sshll.u32 [#allocation7], 4
      %s66 = int_to_ptr.vmem [resolvable:$true] %s65
      %71 = dma.hbm_to_vmem [thread:$0]  %s6, 1024, %s66, [#allocation8], 64, 64, 4
    $region29: #{adaptive_gcn_forward.1} parent=1 // pred_fallthru
      _
    // Predicated region
    $region30: #{adaptive_gcn_forward.1} parent=1 // pred_check
      _
    $region31: #{adaptive_gcn_forward.1} parent=1 // pred_check_branch
      %73 = sbr.rel (0) target = $region33
    $region32: #{adaptive_gcn_forward.1} parent=1 // pred_region
      _
    $region33: #{adaptive_gcn_forward.1} parent=1 // pred_fallthru
      _
    // Predicated region
    $region34: #{adaptive_gcn_forward.1} parent=1 // pred_check
      _
    $region35: #{adaptive_gcn_forward.1} parent=1 // pred_check_branch
      %75 = sbr.rel (0) target = $region37
    $region36: #{adaptive_gcn_forward.1} parent=1 // pred_region
      %s77 = ssub.s32 1024, 1024
      %78 = vsyncadd [#allocation8], %s77
      %s79 = sshll.u32 [#allocation9], 4
      %s80 = int_to_ptr.vmem [resolvable:$true] %s79
      %85 = dma.hbm_to_vmem [thread:$0]  %s8, 1024, %s80, [#allocation8], 64, 64, 4
    $region37: #{adaptive_gcn_forward.1} parent=1 // pred_fallthru
      _
    // Predicated region
    $region38: #{adaptive_gcn_forward.1} parent=1 // pred_check
      _
    $region39: #{adaptive_gcn_forward.1} parent=1 // pred_check_branch
      %87 = sbr.rel (0) target = $region41
    $region40: #{adaptive_gcn_forward.1} parent=1 // pred_region
      _
    $region41: #{adaptive_gcn_forward.1} parent=1 // pred_fallthru
      _
    // Predicated region
    $region42: #{adaptive_gcn_forward.1} parent=1 // pred_check
      _
    $region43: #{adaptive_gcn_forward.1} parent=1 // pred_check_branch
      %89 = sbr.rel (0) target = $region45
    $region44: #{adaptive_gcn_forward.1} parent=1 // pred_region
      %90 = dma.done [#allocation3], 1024
    $region45: #{adaptive_gcn_forward.1} parent=1 // pred_fallthru
      _
    // Predicated region
    $region46: #{adaptive_gcn_forward.1} parent=1 // pred_check
      _
    $region47: #{adaptive_gcn_forward.1} parent=1 // pred_check_branch
      %92 = sbr.rel (0) target = $region49
    $region48: #{adaptive_gcn_forward.1} parent=1 // pred_region
      %93 = dma.done [#allocation5], 1024
    $region49: #{adaptive_gcn_forward.1} parent=1 // pred_fallthru
      _
    // Predicated region
    $region50: #{adaptive_gcn_forward.1} parent=1 // pred_check
      _
    $region51: #{adaptive_gcn_forward.1} parent=1 // pred_check_branch
      %95 = sbr.rel (0) target = $region53
    $region52: #{adaptive_gcn_forward.1} parent=1 // pred_region
      %96 = dma.done [#allocation5], 1024
    $region53: #{adaptive_gcn_forward.1} parent=1 // pred_fallthru
      _
    // Predicated region
    $region54: #{adaptive_gcn_forward.1} parent=1 // pred_check
      _
    $region55: #{adaptive_gcn_forward.1} parent=1 // pred_check_branch
      %98 = sbr.rel (0) target = $region57
    $region56: #{adaptive_gcn_forward.1} parent=1 // pred_region
      %99 = dma.done [#allocation8], 1024
    $region57: #{adaptive_gcn_forward.1} parent=1 // pred_fallthru
      _
    // Predicated region
    $region58: #{adaptive_gcn_forward.1} parent=1 // pred_check
      _
    $region59: #{adaptive_gcn_forward.1} parent=1 // pred_check_branch
      %101 = sbr.rel (0) target = $region61
    $region60: #{adaptive_gcn_forward.1} parent=1 // pred_region
      %102 = dma.done [#allocation8], 1024
    $region61: #{adaptive_gcn_forward.1} parent=1 // pred_fallthru
      _
    %v104 = vld [vmem:[#allocation4] sm:$0xf]
    %v105 = vld [vmem:[#allocation4 + $0x4] sm:$0xf]
    %v106 = vld [vmem:[#allocation4 + $0x8] sm:$0xf]
    %v107 = vld [vmem:[#allocation4 + $0xc] sm:$0xf]
    %v108 = vld [vmem:[#allocation4 + $0x10] sm:$0xf]
    %v109 = vld [vmem:[#allocation4 + $0x14] sm:$0xf]
    %v110 = vld [vmem:[#allocation4 + $0x18] sm:$0xf]
    %v111 = vld [vmem:[#allocation4 + $0x1c] sm:$0xf]
    %v112 = vld [vmem:[#allocation4 + $0x20] sm:$0xf]
    %v113 = vld [vmem:[#allocation4 + $0x24] sm:$0xf]
    %v114 = vld [vmem:[#allocation4 + $0x28] sm:$0xf]
    %v115 = vld [vmem:[#allocation4 + $0x2c] sm:$0xf]
    %v116 = vld [vmem:[#allocation4 + $0x30] sm:$0xf]
    %v117 = vld [vmem:[#allocation4 + $0x34] sm:$0xf]
    %v118 = vld [vmem:[#allocation4 + $0x38] sm:$0xf]
    %v119 = vld [vmem:[#allocation4 + $0x3c] sm:$0xf]
    %v120 = vld [vmem:[#allocation2] sm:$0xf]
    %v121 = vld [vmem:[#allocation2 + $0x4] sm:$0xf]
    %v122 = vld [vmem:[#allocation2 + $0x8] sm:$0xf]
    %v123 = vld [vmem:[#allocation2 + $0xc] sm:$0xf]
    %v124 = vld [vmem:[#allocation2 + $0x10] sm:$0xf]
    %v125 = vld [vmem:[#allocation2 + $0x14] sm:$0xf]
    %v126 = vld [vmem:[#allocation2 + $0x18] sm:$0xf]
    %v127 = vld [vmem:[#allocation2 + $0x1c] sm:$0xf]
    %v128 = vld [vmem:[#allocation2 + $0x20] sm:$0xf]
    %v129 = vld [vmem:[#allocation2 + $0x24] sm:$0xf]
    %v130 = vld [vmem:[#allocation2 + $0x28] sm:$0xf]
    %v131 = vld [vmem:[#allocation2 + $0x2c] sm:$0xf]
    %v132 = vld [vmem:[#allocation2 + $0x30] sm:$0xf]
    %v133 = vld [vmem:[#allocation2 + $0x34] sm:$0xf]
    %v134 = vld [vmem:[#allocation2 + $0x38] sm:$0xf]
    %v135 = vld [vmem:[#allocation2 + $0x3c] sm:$0xf]
    %v136 = vld [vmem:[#allocation6] sm:$0xf]
    %v137 = vld [vmem:[#allocation6 + $0x4] sm:$0xf]
    %v138 = vld [vmem:[#allocation6 + $0x8] sm:$0xf]
    %v139 = vld [vmem:[#allocation6 + $0xc] sm:$0xf]
    %v140 = vld [vmem:[#allocation6 + $0x10] sm:$0xf]
    %v141 = vld [vmem:[#allocation6 + $0x14] sm:$0xf]
    %v142 = vld [vmem:[#allocation6 + $0x18] sm:$0xf]
    %v143 = vld [vmem:[#allocation6 + $0x1c] sm:$0xf]
    %v144 = vld [vmem:[#allocation6 + $0x20] sm:$0xf]
    %v145 = vld [vmem:[#allocation6 + $0x24] sm:$0xf]
    %v146 = vld [vmem:[#allocation6 + $0x28] sm:$0xf]
    %v147 = vld [vmem:[#allocation6 + $0x2c] sm:$0xf]
    %v148 = vld [vmem:[#allocation6 + $0x30] sm:$0xf]
    %v149 = vld [vmem:[#allocation6 + $0x34] sm:$0xf]
    %v150 = vld [vmem:[#allocation6 + $0x38] sm:$0xf]
    %v151 = vld [vmem:[#allocation6 + $0x3c] sm:$0xf]
    %v152 = vld [vmem:[%s4] sm:$0x1]
    %v154 = vlaneseq
    %v155 = vshrl.u32 %v154, 7
    %v156 = vsub.s32 0, %v155
    %v157 = vrot.slane %v152, %v156
    %v175 = vunpack.c.l.b16 %v120
    %v176 = vunpack.c.l.b16 %v121
    %v177 = vunpack.c.l.b16 %v122
    %v178 = vunpack.c.l.b16 %v123
    %v179 = vunpack.c.l.b16 %v124
    %v180 = vunpack.c.l.b16 %v125
    %v181 = vunpack.c.l.b16 %v126
    %v182 = vunpack.c.l.b16 %v127
    %v183 = vunpack.c.l.b16 %v128
    %v184 = vunpack.c.l.b16 %v129
    %v185 = vunpack.c.l.b16 %v130
    %v186 = vunpack.c.l.b16 %v131
    %v187 = vunpack.c.l.b16 %v132
    %v188 = vunpack.c.l.b16 %v133
    %v189 = vunpack.c.l.b16 %v134
    %v190 = vunpack.c.l.b16 %v135
    %v191 = vpack.c.b16 %v176, %v175
    %v192 = vpack.c.b16 %v178, %v177
    %v193 = vpack.c.b16 %v180, %v179
    %v194 = vpack.c.b16 %v182, %v181
    %v195 = vpack.c.b16 %v184, %v183
    %v196 = vpack.c.b16 %v186, %v185
    %v197 = vpack.c.b16 %v188, %v187
    %v198 = vpack.c.b16 %v190, %v189
    %v223 = vunpack.c.l.b16 %v136
    %v224 = vunpack.c.l.b16 %v137
    %v225 = vunpack.c.l.b16 %v138
    %v226 = vunpack.c.l.b16 %v139
    %v227 = vunpack.c.l.b16 %v140
    %v228 = vunpack.c.l.b16 %v141
    %v229 = vunpack.c.l.b16 %v142
    %v230 = vunpack.c.l.b16 %v143
    %v231 = vunpack.c.l.b16 %v144
    %v232 = vunpack.c.l.b16 %v145
    %v233 = vunpack.c.l.b16 %v146
    %v234 = vunpack.c.l.b16 %v147
    %v235 = vunpack.c.l.b16 %v148
    %v236 = vunpack.c.l.b16 %v149
    %v237 = vunpack.c.l.b16 %v150
    %v238 = vunpack.c.l.b16 %v151
    %v239 = vpack.c.b16 %v224, %v223
    %v240 = vpack.c.b16 %v226, %v225
    %v241 = vpack.c.b16 %v228, %v227
    %v242 = vpack.c.b16 %v230, %v229
    %v243 = vpack.c.b16 %v232, %v231
    %v244 = vpack.c.b16 %v234, %v233
    %v245 = vpack.c.b16 %v236, %v235
    %v246 = vpack.c.b16 %v238, %v237
    %255 = vmatprep.subr.bf16.mxu0 0
    %256 = vmatpush1.bf16.msra.mxu0 %v239
    %257 = vmatprep.subr.bf16.mxu0 0
    %258 = vmatpush1.bf16.msra.mxu0 %v240
    %259 = vmatprep.subr.bf16.mxu0 0
    %260 = vmatpush1.bf16.msra.mxu0 %v241
    %261 = vmatprep.subr.bf16.mxu0 0
    %262 = vmatpush1.bf16.msra.mxu0 %v242
    %263 = vmatprep.subr.bf16.mxu0 0
    %264 = vmatpush1.bf16.msra.mxu0 %v243
    %265 = vmatprep.subr.bf16.mxu0 0
    %266 = vmatpush1.bf16.msra.mxu0 %v244
    %267 = vmatprep.subr.bf16.mxu0 0
    %268 = vmatpush1.bf16.msra.mxu0 %v245
    %269 = vmatprep.subr.bf16.mxu0 0
    %270 = vmatpush1.bf16.msra.mxu0 %v246
    %271 = vmatprep.subr.bf16.mxu0 0
    %272 = vmatpush1.bf16.msra.mxu0 0
    %273 = vmatprep.subr.bf16.mxu0 0
    %274 = vmatpush1.bf16.msra.mxu0 0
    %275 = vmatprep.subr.bf16.mxu0 0
    %276 = vmatpush1.bf16.msra.mxu0 0
    %277 = vmatprep.subr.bf16.mxu0 0
    %278 = vmatpush1.bf16.msra.mxu0 0
    %279 = vmatprep.subr.bf16.mxu0 0
    %280 = vmatpush1.bf16.msra.mxu0 0
    %281 = vmatprep.subr.bf16.mxu0 0
    %282 = vmatpush1.bf16.msra.mxu0 0
    %283 = vmatprep.subr.bf16.mxu0 0
    %284 = vmatpush1.bf16.msra.mxu0 0
    %285 = vmatprep.subr.bf16.mxu0 0
    %286 = vmatpush1.bf16.msra.mxu0 0
    %287 = vmatprep.mubr.bf16.mxu0 0
    %288 = vmatmul.mubr.bf16.gmra.mrb[0].mxu0 %v191
    %v289 = vpop.f32.mrb[0].mxu0
    %v290 = vadd.f32 %v157, %v289
    %v291 = vpop.f32.mrb[0].mxu0
    %v292 = vpop.f32.mrb[0].mxu0
    %v293 = vadd.f32 %v157, %v292
    %v294 = vpop.f32.mrb[0].mxu0
    %295 = vmatprep.mubr.bf16.mxu0 0
    %296 = vmatmul.mubr.bf16.gmra.mrb[0].mxu0 %v192
    %v297 = vpop.f32.mrb[0].mxu0
    %v298 = vadd.f32 %v157, %v297
    %v299 = vpop.f32.mrb[0].mxu0
    %v300 = vpop.f32.mrb[0].mxu0
    %v301 = vadd.f32 %v157, %v300
    %v302 = vpop.f32.mrb[0].mxu0
    %303 = vmatprep.mubr.bf16.mxu0 0
    %304 = vmatmul.mubr.bf16.gmra.mrb[0].mxu0 %v193
    %v305 = vpop.f32.mrb[0].mxu0
    %v306 = vadd.f32 %v157, %v305
    %v307 = vpop.f32.mrb[0].mxu0
    %v308 = vpop.f32.mrb[0].mxu0
    %v309 = vadd.f32 %v157, %v308
    %v310 = vpop.f32.mrb[0].mxu0
    %311 = vmatprep.mubr.bf16.mxu0 0
    %312 = vmatmul.mubr.bf16.gmra.mrb[0].mxu0 %v194
    %v313 = vpop.f32.mrb[0].mxu0
    %v314 = vadd.f32 %v157, %v313
    %v315 = vpop.f32.mrb[0].mxu0
    %v316 = vpop.f32.mrb[0].mxu0
    %v317 = vadd.f32 %v157, %v316
    %v318 = vpop.f32.mrb[0].mxu0
    %319 = vmatprep.mubr.bf16.mxu0 0
    %320 = vmatmul.mubr.bf16.gmra.mrb[0].mxu0 %v195
    %v321 = vpop.f32.mrb[0].mxu0
    %v322 = vadd.f32 %v157, %v321
    %v323 = vpop.f32.mrb[0].mxu0
    %v324 = vpop.f32.mrb[0].mxu0
    %v325 = vadd.f32 %v157, %v324
    %v326 = vpop.f32.mrb[0].mxu0
    %327 = vmatprep.mubr.bf16.mxu0 0
    %328 = vmatmul.mubr.bf16.gmra.mrb[0].mxu0 %v196
    %v329 = vpop.f32.mrb[0].mxu0
    %v330 = vadd.f32 %v157, %v329
    %v331 = vpop.f32.mrb[0].mxu0
    %v332 = vpop.f32.mrb[0].mxu0
    %v333 = vadd.f32 %v157, %v332
    %v334 = vpop.f32.mrb[0].mxu0
    %335 = vmatprep.mubr.bf16.mxu0 0
    %336 = vmatmul.mubr.bf16.gmra.mrb[0].mxu0 %v197
    %v337 = vpop.f32.mrb[0].mxu0
    %v338 = vadd.f32 %v157, %v337
    %v339 = vpop.f32.mrb[0].mxu0
    %v340 = vpop.f32.mrb[0].mxu0
    %v341 = vadd.f32 %v157, %v340
    %v342 = vpop.f32.mrb[0].mxu0
    %343 = vmatprep.mubr.bf16.mxu0 0
    %344 = vmatmul.mubr.bf16.gmra.mrb[0].mxu0 %v198
    %v345 = vpop.f32.mrb[0].mxu0
    %v346 = vadd.f32 %v157, %v345
    %v347 = vpop.f32.mrb[0].mxu0
    %v348 = vpop.f32.mrb[0].mxu0
    %v349 = vadd.f32 %v157, %v348
    %v350 = vpop.f32.mrb[0].mxu0
    %351 = vdwg.mxu0
    %v352 = vpack.c.bf16 %v293, %v290
    %v353 = vpack.c.bf16 %v301, %v298
    %v354 = vpack.c.bf16 %v309, %v306
    %v355 = vpack.c.bf16 %v317, %v314
    %v356 = vpack.c.bf16 %v325, %v322
    %v357 = vpack.c.bf16 %v333, %v330
    %v358 = vpack.c.bf16 %v341, %v338
    %v359 = vpack.c.bf16 %v349, %v346
    %v360 = vld [vmem:[%s5] sm:$0x1]
    %v362 = vlaneseq
    %v363 = vshrl.u32 %v362, 7
    %v364 = vsub.s32 0, %v363
    %v365 = vrot.slane %v360, %v364
    %v383 = vunpack.c.l.b16 %v104
    %v384 = vunpack.c.l.b16 %v105
    %v385 = vunpack.c.l.b16 %v106
    %v386 = vunpack.c.l.b16 %v107
    %v387 = vunpack.c.l.b16 %v108
    %v388 = vunpack.c.l.b16 %v109
    %v389 = vunpack.c.l.b16 %v110
    %v390 = vunpack.c.l.b16 %v111
    %v391 = vunpack.c.l.b16 %v112
    %v392 = vunpack.c.l.b16 %v113
    %v393 = vunpack.c.l.b16 %v114
    %v394 = vunpack.c.l.b16 %v115
    %v395 = vunpack.c.l.b16 %v116
    %v396 = vunpack.c.l.b16 %v117
    %v397 = vunpack.c.l.b16 %v118
    %v398 = vunpack.c.l.b16 %v119
    %v399 = vpack.c.b16 %v384, %v383
    %v400 = vpack.c.b16 %v386, %v385
    %v401 = vpack.c.b16 %v388, %v387
    %v402 = vpack.c.b16 %v390, %v389
    %v403 = vpack.c.b16 %v392, %v391
    %v404 = vpack.c.b16 %v394, %v393
    %v405 = vpack.c.b16 %v396, %v395
    %v406 = vpack.c.b16 %v398, %v397
    %415 = vmatprep.subr.bf16.mxu0 0
    %416 = vmatpush1.bf16.msra.mxu0 %v352
    %417 = vmatprep.subr.bf16.mxu0 0
    %418 = vmatpush1.bf16.msra.mxu0 %v353
    %419 = vmatprep.subr.bf16.mxu0 0
    %420 = vmatpush1.bf16.msra.mxu0 %v354
    %421 = vmatprep.subr.bf16.mxu0 0
    %422 = vmatpush1.bf16.msra.mxu0 %v355
    %423 = vmatprep.subr.bf16.mxu0 0
    %424 = vmatpush1.bf16.msra.mxu0 %v356
    %425 = vmatprep.subr.bf16.mxu0 0
    %426 = vmatpush1.bf16.msra.mxu0 %v357
    %427 = vmatprep.subr.bf16.mxu0 0
    %428 = vmatpush1.bf16.msra.mxu0 %v358
    %429 = vmatprep.subr.bf16.mxu0 0
    %430 = vmatpush1.bf16.msra.mxu0 %v359
    %431 = vmatprep.subr.bf16.mxu0 0
    %432 = vmatpush1.bf16.msra.mxu0 0
    %433 = vmatprep.subr.bf16.mxu0 0
    %434 = vmatpush1.bf16.msra.mxu0 0
    %435 = vmatprep.subr.bf16.mxu0 0
    %436 = vmatpush1.bf16.msra.mxu0 0
    %437 = vmatprep.subr.bf16.mxu0 0
    %438 = vmatpush1.bf16.msra.mxu0 0
    %439 = vmatprep.subr.bf16.mxu0 0
    %440 = vmatpush1.bf16.msra.mxu0 0
    %441 = vmatprep.subr.bf16.mxu0 0
    %442 = vmatpush1.bf16.msra.mxu0 0
    %443 = vmatprep.subr.bf16.mxu0 0
    %444 = vmatpush1.bf16.msra.mxu0 0
    %445 = vmatprep.subr.bf16.mxu0 0
    %446 = vmatpush1.bf16.msra.mxu0 0
    %447 = vmatprep.mubr.bf16.mxu0 0
    %448 = vmatmul.mubr.bf16.gmra.mrb[0].mxu0 %v399
    %v449 = vpop.f32.mrb[0].mxu0
    %v450 = vadd.f32 %v365, %v449
    %v451 = vpop.f32.mrb[0].mxu0
    %v452 = vpop.f32.mrb[0].mxu0
    %v453 = vadd.f32 %v365, %v452
    %v454 = vpop.f32.mrb[0].mxu0
    %455 = vmatprep.mubr.bf16.mxu0 0
    %456 = vmatmul.mubr.bf16.gmra.mrb[0].mxu0 %v400
    %v457 = vpop.f32.mrb[0].mxu0
    %v458 = vadd.f32 %v365, %v457
    %v459 = vpop.f32.mrb[0].mxu0
    %v460 = vpop.f32.mrb[0].mxu0
    %v461 = vadd.f32 %v365, %v460
    %v462 = vpop.f32.mrb[0].mxu0
    %463 = vmatprep.mubr.bf16.mxu0 0
    %464 = vmatmul.mubr.bf16.gmra.mrb[0].mxu0 %v401
    %v465 = vpop.f32.mrb[0].mxu0
    %v466 = vadd.f32 %v365, %v465
    %v467 = vpop.f32.mrb[0].mxu0
    %v468 = vpop.f32.mrb[0].mxu0
    %v469 = vadd.f32 %v365, %v468
    %v470 = vpop.f32.mrb[0].mxu0
    %471 = vmatprep.mubr.bf16.mxu0 0
    %472 = vmatmul.mubr.bf16.gmra.mrb[0].mxu0 %v402
    %v473 = vpop.f32.mrb[0].mxu0
    %v474 = vadd.f32 %v365, %v473
    %v475 = vpop.f32.mrb[0].mxu0
    %v476 = vpop.f32.mrb[0].mxu0
    %v477 = vadd.f32 %v365, %v476
    %v478 = vpop.f32.mrb[0].mxu0
    %479 = vmatprep.mubr.bf16.mxu0 0
    %480 = vmatmul.mubr.bf16.gmra.mrb[0].mxu0 %v403
    %v481 = vpop.f32.mrb[0].mxu0
    %v482 = vadd.f32 %v365, %v481
    %v483 = vpop.f32.mrb[0].mxu0
    %v484 = vpop.f32.mrb[0].mxu0
    %v485 = vadd.f32 %v365, %v484
    %v486 = vpop.f32.mrb[0].mxu0
    %487 = vmatprep.mubr.bf16.mxu0 0
    %488 = vmatmul.mubr.bf16.gmra.mrb[0].mxu0 %v404
    %v489 = vpop.f32.mrb[0].mxu0
    %v490 = vadd.f32 %v365, %v489
    %v491 = vpop.f32.mrb[0].mxu0
    %v492 = vpop.f32.mrb[0].mxu0
    %v493 = vadd.f32 %v365, %v492
    %v494 = vpop.f32.mrb[0].mxu0
    %495 = vmatprep.mubr.bf16.mxu0 0
    %496 = vmatmul.mubr.bf16.gmra.mrb[0].mxu0 %v405
    %v497 = vpop.f32.mrb[0].mxu0
    %v498 = vadd.f32 %v365, %v497
    %v499 = vpop.f32.mrb[0].mxu0
    %v500 = vpop.f32.mrb[0].mxu0
    %v501 = vadd.f32 %v365, %v500
    %v502 = vpop.f32.mrb[0].mxu0
    %503 = vmatprep.mubr.bf16.mxu0 0
    %504 = vmatmul.mubr.bf16.gmra.mrb[0].mxu0 %v406
    %v505 = vpop.f32.mrb[0].mxu0
    %v506 = vadd.f32 %v365, %v505
    %v507 = vpop.f32.mrb[0].mxu0
    %v508 = vpop.f32.mrb[0].mxu0
    %v509 = vadd.f32 %v365, %v508
    %v510 = vpop.f32.mrb[0].mxu0
    %511 = vdwg.mxu0
    %v512 = vmax.f32 %v450, 0.0
    %v513 = vmax.f32 %v453, 0.0
    %v514 = vmax.f32 %v458, 0.0
    %v515 = vmax.f32 %v461, 0.0
    %v516 = vmax.f32 %v466, 0.0
    %v517 = vmax.f32 %v469, 0.0
    %v518 = vmax.f32 %v474, 0.0
    %v519 = vmax.f32 %v477, 0.0
    %v520 = vmax.f32 %v482, 0.0
    %v521 = vmax.f32 %v485, 0.0
    %v522 = vmax.f32 %v490, 0.0
    %v523 = vmax.f32 %v493, 0.0
    %v524 = vmax.f32 %v498, 0.0
    %v525 = vmax.f32 %v501, 0.0
    %v526 = vmax.f32 %v506, 0.0
    %v527 = vmax.f32 %v509, 0.0
    %v528 = vpack.c.bf16 %v513, %v512
    %v529 = vpack.c.bf16 %v515, %v514
    %v530 = vpack.c.bf16 %v517, %v516
    %v531 = vpack.c.bf16 %v519, %v518
    %v532 = vpack.c.bf16 %v521, %v520
    %v533 = vpack.c.bf16 %v523, %v522
    %v534 = vpack.c.bf16 %v525, %v524
    %v535 = vpack.c.bf16 %v527, %v526
    %v536 = vld [vmem:[#allocation7] sm:$0xf]
    %v537 = vld [vmem:[#allocation7 + $0x4] sm:$0xf]
    %v538 = vld [vmem:[#allocation7 + $0x8] sm:$0xf]
    %v539 = vld [vmem:[#allocation7 + $0xc] sm:$0xf]
    %v540 = vld [vmem:[#allocation7 + $0x10] sm:$0xf]
    %v541 = vld [vmem:[#allocation7 + $0x14] sm:$0xf]
    %v542 = vld [vmem:[#allocation7 + $0x18] sm:$0xf]
    %v543 = vld [vmem:[#allocation7 + $0x1c] sm:$0xf]
    %v544 = vld [vmem:[#allocation7 + $0x20] sm:$0xf]
    %v545 = vld [vmem:[#allocation7 + $0x24] sm:$0xf]
    %v546 = vld [vmem:[#allocation7 + $0x28] sm:$0xf]
    %v547 = vld [vmem:[#allocation7 + $0x2c] sm:$0xf]
    %v548 = vld [vmem:[#allocation7 + $0x30] sm:$0xf]
    %v549 = vld [vmem:[#allocation7 + $0x34] sm:$0xf]
    %v550 = vld [vmem:[#allocation7 + $0x38] sm:$0xf]
    %v551 = vld [vmem:[#allocation7 + $0x3c] sm:$0xf]
    %v568 = vunpack.c.l.b16 %v536
    %v569 = vunpack.c.l.b16 %v537
    %v570 = vunpack.c.l.b16 %v538
    %v571 = vunpack.c.l.b16 %v539
    %v572 = vunpack.c.l.b16 %v540
    %v573 = vunpack.c.l.b16 %v541
    %v574 = vunpack.c.l.b16 %v542
    %v575 = vunpack.c.l.b16 %v543
    %v576 = vunpack.c.l.b16 %v544
    %v577 = vunpack.c.l.b16 %v545
    %v578 = vunpack.c.l.b16 %v546
    %v579 = vunpack.c.l.b16 %v547
    %v580 = vunpack.c.l.b16 %v548
    %v581 = vunpack.c.l.b16 %v549
    %v582 = vunpack.c.l.b16 %v550
    %v583 = vunpack.c.l.b16 %v551
    %v584 = vpack.c.b16 %v569, %v568
    %v585 = vpack.c.b16 %v571, %v570
    %v586 = vpack.c.b16 %v573, %v572
    %v587 = vpack.c.b16 %v575, %v574
    %v588 = vpack.c.b16 %v577, %v576
    %v589 = vpack.c.b16 %v579, %v578
    %v590 = vpack.c.b16 %v581, %v580
    %v591 = vpack.c.b16 %v583, %v582
    %600 = vmatprep.subr.bf16.mxu0 0
    %601 = vmatpush1.bf16.msra.mxu0 %v584
    %602 = vmatprep.subr.bf16.mxu0 0
    %603 = vmatpush1.bf16.msra.mxu0 %v585
    %604 = vmatprep.subr.bf16.mxu0 0
    %605 = vmatpush1.bf16.msra.mxu0 %v586
    %606 = vmatprep.subr.bf16.mxu0 0
    %607 = vmatpush1.bf16.msra.mxu0 %v587
    %608 = vmatprep.subr.bf16.mxu0 0
    %609 = vmatpush1.bf16.msra.mxu0 %v588
    %610 = vmatprep.subr.bf16.mxu0 0
    %611 = vmatpush1.bf16.msra.mxu0 %v589
    %612 = vmatprep.subr.bf16.mxu0 0
    %613 = vmatpush1.bf16.msra.mxu0 %v590
    %614 = vmatprep.subr.bf16.mxu0 0
    %615 = vmatpush1.bf16.msra.mxu0 %v591
    %616 = vmatprep.subr.bf16.mxu0 0
    %617 = vmatpush1.bf16.msra.mxu0 0
    %618 = vmatprep.subr.bf16.mxu0 0
    %619 = vmatpush1.bf16.msra.mxu0 0
    %620 = vmatprep.subr.bf16.mxu0 0
    %621 = vmatpush1.bf16.msra.mxu0 0
    %622 = vmatprep.subr.bf16.mxu0 0
    %623 = vmatpush1.bf16.msra.mxu0 0
    %624 = vmatprep.subr.bf16.mxu0 0
    %625 = vmatpush1.bf16.msra.mxu0 0
    %626 = vmatprep.subr.bf16.mxu0 0
    %627 = vmatpush1.bf16.msra.mxu0 0
    %628 = vmatprep.subr.bf16.mxu0 0
    %629 = vmatpush1.bf16.msra.mxu0 0
    %630 = vmatprep.subr.bf16.mxu0 0
    %631 = vmatpush1.bf16.msra.mxu0 0
    %632 = vmatprep.mubr.bf16.mxu0 0
    %633 = vmatmul.mubr.bf16.gmra.mrb[0].mxu0 %v528
    %v634 = vpop.f32.mrb[0].mxu0
    %v635 = vadd.f32 0.0, %v634
    %v636 = vpop.f32.mrb[0].mxu0
    %v637 = vpop.f32.mrb[0].mxu0
    %v638 = vadd.f32 0.0, %v637
    %v639 = vpop.f32.mrb[0].mxu0
    %640 = vmatprep.mubr.bf16.mxu0 0
    %641 = vmatmul.mubr.bf16.gmra.mrb[0].mxu0 %v529
    %v642 = vpop.f32.mrb[0].mxu0
    %v643 = vadd.f32 0.0, %v642
    %v644 = vpop.f32.mrb[0].mxu0
    %v645 = vpop.f32.mrb[0].mxu0
    %v646 = vadd.f32 0.0, %v645
    %v647 = vpop.f32.mrb[0].mxu0
    %648 = vmatprep.mubr.bf16.mxu0 0
    %649 = vmatmul.mubr.bf16.gmra.mrb[0].mxu0 %v530
    %v650 = vpop.f32.mrb[0].mxu0
    %v651 = vadd.f32 0.0, %v650
    %v652 = vpop.f32.mrb[0].mxu0
    %v653 = vpop.f32.mrb[0].mxu0
    %v654 = vadd.f32 0.0, %v653
    %v655 = vpop.f32.mrb[0].mxu0
    %656 = vmatprep.mubr.bf16.mxu0 0
    %657 = vmatmul.mubr.bf16.gmra.mrb[0].mxu0 %v531
    %v658 = vpop.f32.mrb[0].mxu0
    %v659 = vadd.f32 0.0, %v658
    %v660 = vpop.f32.mrb[0].mxu0
    %v661 = vpop.f32.mrb[0].mxu0
    %v662 = vadd.f32 0.0, %v661
    %v663 = vpop.f32.mrb[0].mxu0
    %664 = vmatprep.mubr.bf16.mxu0 0
    %665 = vmatmul.mubr.bf16.gmra.mrb[0].mxu0 %v532
    %v666 = vpop.f32.mrb[0].mxu0
    %v667 = vadd.f32 0.0, %v666
    %v668 = vpop.f32.mrb[0].mxu0
    %v669 = vpop.f32.mrb[0].mxu0
    %v670 = vadd.f32 0.0, %v669
    %v671 = vpop.f32.mrb[0].mxu0
    %672 = vmatprep.mubr.bf16.mxu0 0
    %673 = vmatmul.mubr.bf16.gmra.mrb[0].mxu0 %v533
    %v674 = vpop.f32.mrb[0].mxu0
    %v675 = vadd.f32 0.0, %v674
    %v676 = vpop.f32.mrb[0].mxu0
    %v677 = vpop.f32.mrb[0].mxu0
    %v678 = vadd.f32 0.0, %v677
    %v679 = vpop.f32.mrb[0].mxu0
    %680 = vmatprep.mubr.bf16.mxu0 0
    %681 = vmatmul.mubr.bf16.gmra.mrb[0].mxu0 %v534
    %v682 = vpop.f32.mrb[0].mxu0
    %v683 = vadd.f32 0.0, %v682
    %v684 = vpop.f32.mrb[0].mxu0
    %v685 = vpop.f32.mrb[0].mxu0
    %v686 = vadd.f32 0.0, %v685
    %v687 = vpop.f32.mrb[0].mxu0
    %688 = vmatprep.mubr.bf16.mxu0 0
    %689 = vmatmul.mubr.bf16.gmra.mrb[0].mxu0 %v535
    %v690 = vpop.f32.mrb[0].mxu0
    %v691 = vadd.f32 0.0, %v690
    %v692 = vpop.f32.mrb[0].mxu0
    %v693 = vpop.f32.mrb[0].mxu0
    %v694 = vadd.f32 0.0, %v693
    %v695 = vpop.f32.mrb[0].mxu0
    %696 = vdwg.mxu0
    %v697 = vpack.c.bf16 %v638, %v635
    %v698 = vpack.c.bf16 %v646, %v643
    %v699 = vpack.c.bf16 %v654, %v651
    %v700 = vpack.c.bf16 %v662, %v659
    %v701 = vpack.c.bf16 %v670, %v667
    %v702 = vpack.c.bf16 %v678, %v675
    %v703 = vpack.c.bf16 %v686, %v683
    %v704 = vpack.c.bf16 %v694, %v691
    %v705 = vld [vmem:[%s7] sm:$0x1]
    %v707 = vlaneseq
    %v708 = vshrl.u32 %v707, 7
    %v709 = vsub.s32 0, %v708
    %v710 = vrot.slane %v705, %v709
    %712 = vmatprep.subr.bf16.mxu0 0
    %713 = vmatpush1.bf16.msra.mxu0 %v697
    %714 = vmatprep.subr.bf16.mxu0 0
    %715 = vmatpush1.bf16.msra.mxu0 %v698
    %716 = vmatprep.subr.bf16.mxu0 0
    %717 = vmatpush1.bf16.msra.mxu0 %v699
    %718 = vmatprep.subr.bf16.mxu0 0
    %719 = vmatpush1.bf16.msra.mxu0 %v700
    %720 = vmatprep.subr.bf16.mxu0 0
    %721 = vmatpush1.bf16.msra.mxu0 %v701
    %722 = vmatprep.subr.bf16.mxu0 0
    %723 = vmatpush1.bf16.msra.mxu0 %v702
    %724 = vmatprep.subr.bf16.mxu0 0
    %725 = vmatpush1.bf16.msra.mxu0 %v703
    %726 = vmatprep.subr.bf16.mxu0 0
    %727 = vmatpush1.bf16.msra.mxu0 %v704
    %728 = vmatprep.subr.bf16.mxu0 0
    %729 = vmatpush1.bf16.msra.mxu0 0
    %730 = vmatprep.subr.bf16.mxu0 0
    %731 = vmatpush1.bf16.msra.mxu0 0
    %732 = vmatprep.subr.bf16.mxu0 0
    %733 = vmatpush1.bf16.msra.mxu0 0
    %734 = vmatprep.subr.bf16.mxu0 0
    %735 = vmatpush1.bf16.msra.mxu0 0
    %736 = vmatprep.subr.bf16.mxu0 0
    %737 = vmatpush1.bf16.msra.mxu0 0
    %738 = vmatprep.subr.bf16.mxu0 0
    %739 = vmatpush1.bf16.msra.mxu0 0
    %740 = vmatprep.subr.bf16.mxu0 0
    %741 = vmatpush1.bf16.msra.mxu0 0
    %742 = vmatprep.subr.bf16.mxu0 0
    %743 = vmatpush1.bf16.msra.mxu0 0
    %744 = vmatprep.mubr.bf16.mxu0 0
    %745 = vmatmul.mubr.bf16.gmra.mrb[0].mxu0 %v399
    %v746 = vpop.f32.mrb[0].mxu0
    %v747 = vadd.f32 %v710, %v746
    %v748 = vpop.f32.mrb[0].mxu0
    %v749 = vpop.f32.mrb[0].mxu0
    %v750 = vadd.f32 %v710, %v749
    %v751 = vpop.f32.mrb[0].mxu0
    %752 = vmatprep.mubr.bf16.mxu0 0
    %753 = vmatmul.mubr.bf16.gmra.mrb[0].mxu0 %v400
    %v754 = vpop.f32.mrb[0].mxu0
    %v755 = vadd.f32 %v710, %v754
    %v756 = vpop.f32.mrb[0].mxu0
    %v757 = vpop.f32.mrb[0].mxu0
    %v758 = vadd.f32 %v710, %v757
    %v759 = vpop.f32.mrb[0].mxu0
    %760 = vmatprep.mubr.bf16.mxu0 0
    %761 = vmatmul.mubr.bf16.gmra.mrb[0].mxu0 %v401
    %v762 = vpop.f32.mrb[0].mxu0
    %v763 = vadd.f32 %v710, %v762
    %v764 = vpop.f32.mrb[0].mxu0
    %v765 = vpop.f32.mrb[0].mxu0
    %v766 = vadd.f32 %v710, %v765
    %v767 = vpop.f32.mrb[0].mxu0
    %768 = vmatprep.mubr.bf16.mxu0 0
    %769 = vmatmul.mubr.bf16.gmra.mrb[0].mxu0 %v402
    %v770 = vpop.f32.mrb[0].mxu0
    %v771 = vadd.f32 %v710, %v770
    %v772 = vpop.f32.mrb[0].mxu0
    %v773 = vpop.f32.mrb[0].mxu0
    %v774 = vadd.f32 %v710, %v773
    %v775 = vpop.f32.mrb[0].mxu0
    %776 = vmatprep.mubr.bf16.mxu0 0
    %777 = vmatmul.mubr.bf16.gmra.mrb[0].mxu0 %v403
    %v778 = vpop.f32.mrb[0].mxu0
    %v779 = vadd.f32 %v710, %v778
    %v780 = vpop.f32.mrb[0].mxu0
    %v781 = vpop.f32.mrb[0].mxu0
    %v782 = vadd.f32 %v710, %v781
    %v783 = vpop.f32.mrb[0].mxu0
    %784 = vmatprep.mubr.bf16.mxu0 0
    %785 = vmatmul.mubr.bf16.gmra.mrb[0].mxu0 %v404
    %v786 = vpop.f32.mrb[0].mxu0
    %v787 = vadd.f32 %v710, %v786
    %v788 = vpop.f32.mrb[0].mxu0
    %v789 = vpop.f32.mrb[0].mxu0
    %v790 = vadd.f32 %v710, %v789
    %v791 = vpop.f32.mrb[0].mxu0
    %792 = vmatprep.mubr.bf16.mxu0 0
    %793 = vmatmul.mubr.bf16.gmra.mrb[0].mxu0 %v405
    %v794 = vpop.f32.mrb[0].mxu0
    %v795 = vadd.f32 %v710, %v794
    %v796 = vpop.f32.mrb[0].mxu0
    %v797 = vpop.f32.mrb[0].mxu0
    %v798 = vadd.f32 %v710, %v797
    %v799 = vpop.f32.mrb[0].mxu0
    %800 = vmatprep.mubr.bf16.mxu0 0
    %801 = vmatmul.mubr.bf16.gmra.mrb[0].mxu0 %v406
    %v802 = vpop.f32.mrb[0].mxu0
    %v803 = vadd.f32 %v710, %v802
    %v804 = vpop.f32.mrb[0].mxu0
    %v805 = vpop.f32.mrb[0].mxu0
    %v806 = vadd.f32 %v710, %v805
    %v807 = vpop.f32.mrb[0].mxu0
    %808 = vdwg.mxu0
    %v809 = vmax.f32 %v747, 0.0
    %v810 = vmax.f32 %v750, 0.0
    %v811 = vmax.f32 %v755, 0.0
    %v812 = vmax.f32 %v758, 0.0
    %v813 = vmax.f32 %v763, 0.0
    %v814 = vmax.f32 %v766, 0.0
    %v815 = vmax.f32 %v771, 0.0
    %v816 = vmax.f32 %v774, 0.0
    %v817 = vmax.f32 %v779, 0.0
    %v818 = vmax.f32 %v782, 0.0
    %v819 = vmax.f32 %v787, 0.0
    %v820 = vmax.f32 %v790, 0.0
    %v821 = vmax.f32 %v795, 0.0
    %v822 = vmax.f32 %v798, 0.0
    %v823 = vmax.f32 %v803, 0.0
    %v824 = vmax.f32 %v806, 0.0
    %v825 = vld [vmem:[%s2] sm:$0xf]
    %v826 = vpack.c.bf16 %v810, %v809
    %v827 = vpack.c.bf16 %v812, %v811
    %v828 = vpack.c.bf16 %v814, %v813
    %v829 = vpack.c.bf16 %v816, %v815
    %v830 = vpack.c.bf16 %v818, %v817
    %v831 = vpack.c.bf16 %v820, %v819
    %v832 = vpack.c.bf16 %v822, %v821
    %v833 = vpack.c.bf16 %v824, %v823
    %834 = vmatprep.subr.bf16.mxu0 0
    %835 = vmatpush1.bf16.msra.mxu0 %v826
    %836 = vmatprep.subr.bf16.mxu0 0
    %837 = vmatpush1.bf16.msra.mxu0 %v827
    %838 = vmatprep.subr.bf16.mxu0 0
    %839 = vmatpush1.bf16.msra.mxu0 %v828
    %840 = vmatprep.subr.bf16.mxu0 0
    %841 = vmatpush1.bf16.msra.mxu0 %v829
    %842 = vmatprep.subr.bf16.mxu0 0
    %843 = vmatpush1.bf16.msra.mxu0 %v830
    %844 = vmatprep.subr.bf16.mxu0 0
    %845 = vmatpush1.bf16.msra.mxu0 %v831
    %846 = vmatprep.subr.bf16.mxu0 0
    %847 = vmatpush1.bf16.msra.mxu0 %v832
    %848 = vmatprep.subr.bf16.mxu0 0
    %849 = vmatpush1.bf16.msra.mxu0 %v833
    %850 = vmatprep.subr.bf16.mxu0 0
    %851 = vmatpush1.bf16.msra.mxu0 0
    %852 = vmatprep.subr.bf16.mxu0 0
    %853 = vmatpush1.bf16.msra.mxu0 0
    %854 = vmatprep.subr.bf16.mxu0 0
    %855 = vmatpush1.bf16.msra.mxu0 0
    %856 = vmatprep.subr.bf16.mxu0 0
    %857 = vmatpush1.bf16.msra.mxu0 0
    %858 = vmatprep.subr.bf16.mxu0 0
    %859 = vmatpush1.bf16.msra.mxu0 0
    %860 = vmatprep.subr.bf16.mxu0 0
    %861 = vmatpush1.bf16.msra.mxu0 0
    %862 = vmatprep.subr.bf16.mxu0 0
    %863 = vmatpush1.bf16.msra.mxu0 0
    %864 = vmatprep.subr.bf16.mxu0 0
    %865 = vmatpush1.bf16.msra.mxu0 0
    %866 = vmatprep.mubr.bf16.mxu0 0
    %867 = vmatmul.mubr.bf16.gmra.mrb[0].mxu0 %v825
    %v868 = vpop.f32.mrb[0].mxu0
    %v869 = vadd.f32 0.0, %v868
    %v870 = vpop.f32.mrb[0].mxu0
    %v871 = vpop.f32.mrb[0].mxu0
    %v872 = vpop.f32.mrb[0].mxu0
    %873 = vdwg.mxu0
    %v874 = vpack.c.bf16 %v869, %v869
    %v875 = vld [vmem:[#allocation9] sm:$0xf]
    %v876 = vld [vmem:[#allocation9 + $0x4] sm:$0xf]
    %v877 = vld [vmem:[#allocation9 + $0x8] sm:$0xf]
    %v878 = vld [vmem:[#allocation9 + $0xc] sm:$0xf]
    %v879 = vld [vmem:[#allocation9 + $0x10] sm:$0xf]
    %v880 = vld [vmem:[#allocation9 + $0x14] sm:$0xf]
    %v881 = vld [vmem:[#allocation9 + $0x18] sm:$0xf]
    %v882 = vld [vmem:[#allocation9 + $0x1c] sm:$0xf]
    %v883 = vld [vmem:[#allocation9 + $0x20] sm:$0xf]
    %v884 = vld [vmem:[#allocation9 + $0x24] sm:$0xf]
    %v885 = vld [vmem:[#allocation9 + $0x28] sm:$0xf]
    %v886 = vld [vmem:[#allocation9 + $0x2c] sm:$0xf]
    %v887 = vld [vmem:[#allocation9 + $0x30] sm:$0xf]
    %v888 = vld [vmem:[#allocation9 + $0x34] sm:$0xf]
    %v889 = vld [vmem:[#allocation9 + $0x38] sm:$0xf]
    %v890 = vld [vmem:[#allocation9 + $0x3c] sm:$0xf]
    %v891 = vld [vmem:[%s9] sm:$0x1]
    %v893 = vlaneseq
    %v894 = vshrl.u32 %v893, 7
    %v895 = vsub.s32 0, %v894
    %v896 = vrot.slane %v891, %v895
    %v914 = vunpack.c.l.b16 %v875
    %v915 = vunpack.c.l.b16 %v876
    %v916 = vunpack.c.l.b16 %v877
    %v917 = vunpack.c.l.b16 %v878
    %v918 = vunpack.c.l.b16 %v879
    %v919 = vunpack.c.l.b16 %v880
    %v920 = vunpack.c.l.b16 %v881
    %v921 = vunpack.c.l.b16 %v882
    %v922 = vunpack.c.l.b16 %v883
    %v923 = vunpack.c.l.b16 %v884
    %v924 = vunpack.c.l.b16 %v885
    %v925 = vunpack.c.l.b16 %v886
    %v926 = vunpack.c.l.b16 %v887
    %v927 = vunpack.c.l.b16 %v888
    %v928 = vunpack.c.l.b16 %v889
    %v929 = vunpack.c.l.b16 %v890
    %v930 = vpack.c.b16 %v915, %v914
    %v931 = vpack.c.b16 %v917, %v916
    %v932 = vpack.c.b16 %v919, %v918
    %v933 = vpack.c.b16 %v921, %v920
    %v934 = vpack.c.b16 %v923, %v922
    %v935 = vpack.c.b16 %v925, %v924
    %v936 = vpack.c.b16 %v927, %v926
    %v937 = vpack.c.b16 %v929, %v928
    %946 = vmatprep.subr.bf16.mxu0 0
    %947 = vmatpush1.bf16.msra.mxu0 %v930
    %948 = vmatprep.subr.bf16.mxu0 0
    %949 = vmatpush1.bf16.msra.mxu0 %v931
    %950 = vmatprep.subr.bf16.mxu0 0
    %951 = vmatpush1.bf16.msra.mxu0 %v932
    %952 = vmatprep.subr.bf16.mxu0 0
    %953 = vmatpush1.bf16.msra.mxu0 %v933
    %954 = vmatprep.subr.bf16.mxu0 0
    %955 = vmatpush1.bf16.msra.mxu0 %v934
    %956 = vmatprep.subr.bf16.mxu0 0
    %957 = vmatpush1.bf16.msra.mxu0 %v935
    %958 = vmatprep.subr.bf16.mxu0 0
    %959 = vmatpush1.bf16.msra.mxu0 %v936
    %960 = vmatprep.subr.bf16.mxu0 0
    %961 = vmatpush1.bf16.msra.mxu0 %v937
    %962 = vmatprep.subr.bf16.mxu0 0
    %963 = vmatpush1.bf16.msra.mxu0 0
    %964 = vmatprep.subr.bf16.mxu0 0
    %965 = vmatpush1.bf16.msra.mxu0 0
    %966 = vmatprep.subr.bf16.mxu0 0
    %967 = vmatpush1.bf16.msra.mxu0 0
    %968 = vmatprep.subr.bf16.mxu0 0
    %969 = vmatpush1.bf16.msra.mxu0 0
    %970 = vmatprep.subr.bf16.mxu0 0
    %971 = vmatpush1.bf16.msra.mxu0 0
    %972 = vmatprep.subr.bf16.mxu0 0
    %973 = vmatpush1.bf16.msra.mxu0 0
    %974 = vmatprep.subr.bf16.mxu0 0
    %975 = vmatpush1.bf16.msra.mxu0 0
    %976 = vmatprep.subr.bf16.mxu0 0
    %977 = vmatpush1.bf16.msra.mxu0 0
    %978 = vmatprep.mubr.bf16.mxu0 0
    %979 = vmatmul.mubr.bf16.gmra.mrb[0].mxu0 %v874
    %v980 = vpop.f32.mrb[0].mxu0
    %v981 = vadd.f32 %v896, %v980
    %v982 = vpop.f32.mrb[0].mxu0
    %v983 = vpop.f32.mrb[0].mxu0
    %v984 = vpop.f32.mrb[0].mxu0
    %985 = vdwg.mxu0
    %986 = vst [vmem:[%s10] sm:$0xff] %v981
    // Predicated region
    $region62: #{adaptive_gcn_forward.1} parent=1 // pred_check
      _
    $region63: #{adaptive_gcn_forward.1} parent=1 // pred_check_branch
      %988 = sbr.rel (0) target = $region65
    $region64: #{adaptive_gcn_forward.1} parent=1 // pred_region
      _
    $region65: #{adaptive_gcn_forward.1} parent=1 // pred_fallthru
      _
    // Predicated region
    $region66: #{adaptive_gcn_forward.1} parent=1 // pred_check
      _
    $region67: #{adaptive_gcn_forward.1} parent=1 // pred_check_branch
      %990 = sbr.rel (0) target = $region69
    $region68: #{adaptive_gcn_forward.1} parent=1 // pred_region
      _
    $region69: #{adaptive_gcn_forward.1} parent=1 // pred_fallthru
      _
    %991 = vsyncpa [#allocation3], 1
    %992 = vsyncpa [#allocation5], 1
    %993 = vsyncpa [#allocation8], 1

</llo_original>
